<compile_context>
chip_gen: v7x
topology: tpu7x:2x2x1
jax: 0.10.0
libtpu: 0.0.40
codegen_flags: <defaults>
</compile_context>

<pallas_src>
import functools

import jax
import jax.numpy as jnp
from jax.experimental import pallas as pl
from jax.experimental.pallas import tpu as pltpu


_LANE = 512       # lane-dense last dim (multiple of 128)
_ROW_TILE = 512   # max sublane rows per block (512 x 512 f32 = 1 MiB)


# ----------------------------- pass 1: global reductions ----------------------


def _absmax_kernel(x_ref, o_ref):
    """Resident (1,1) accumulator: running max of |x| over all row-tiles."""
    @pl.when(pl.program_id(0) == 0)
    def _():
        o_ref[...] = jnp.zeros_like(o_ref)
    a = jnp.abs(x_ref[...].astype(jnp.float32))
    blk = jnp.max(jnp.max(a, axis=-1, keepdims=True), axis=-2, keepdims=True)
    o_ref[...] = jnp.maximum(o_ref[...], blk)


def _abssum_kernel(x_ref, o_ref):
    """Resident (1,1) accumulator: running sum of |x| (zero padding is inert)."""
    @pl.when(pl.program_id(0) == 0)
    def _():
        o_ref[...] = jnp.zeros_like(o_ref)
    a = jnp.abs(x_ref[...].astype(jnp.float32))
    blk = jnp.sum(jnp.sum(a, axis=-1, keepdims=True), axis=-2, keepdims=True)
    o_ref[...] = o_ref[...] + blk


# ----------------------------- pass 2: elementwise apply ----------------------


def _kbit_apply_kernel(s_ref, x_ref, o_ref, *, n, two_over_n):
    """w_bit in [2,8]: tanh -> affine by precomputed scalar -> uniform quantize."""
    inv_2m = s_ref[0]                                   # 0.5 / max|tanh(x)|, from SMEM
    w = jnp.tanh(x_ref[...].astype(jnp.float32))
    w = w * inv_2m + 0.5
    o_ref[...] = (jnp.round(w * n) * two_over_n - 1.0).astype(o_ref.dtype)


def _binary_apply_kernel(s_ref, x_ref, o_ref):
    """w_bit == 1: out = sign(x) * E  (E = mean|x| >= 0, so sign(x/E) == sign(x))."""
    e = s_ref[0]                                        # mean|x|, from SMEM
    x = x_ref[...].astype(jnp.float32)
    o_ref[...] = (jnp.sign(x) * e).astype(o_ref.dtype)


# ----------------------------- pallas_call wrappers ----------------------------


def _pack_lane_dense(x):
    """Flatten x and repack into a zero-padded lane-dense (rows, _LANE) slab."""
    total = x.size
    flat = x.reshape(-1)
    rows_needed = (total + _LANE - 1) // _LANE
    if rows_needed <= _ROW_TILE:
        tr = int(rows_needed)                 # single row-block (full extent)
        rows = tr
    else:
        tr = _ROW_TILE                        # 512-row tiles (multiple of 8)
        rows = ((rows_needed + tr - 1) // tr) * tr
    pad = rows * _LANE - total
    if pad:
        flat = jnp.pad(flat, (0, pad))
    return flat.reshape(rows, _LANE), tr, rows // tr


def _global_scalar(kernel, x2, tr, n_blocks):
    """Tiled reduction pass -> (1,1) f32 scalar."""
    return pl.pallas_call(
        kernel,
        out_shape=jax.ShapeDtypeStruct((1, 1), jnp.float32),
        grid=(n_blocks,),
        in_specs=[pl.BlockSpec((tr, _LANE), lambda i: (i, 0))],
        out_specs=pl.BlockSpec((1, 1), lambda i: (0, 0)),
        compiler_params=pltpu.CompilerParams(
            dimension_semantics=("arbitrary",)),
    )(x2)


def _apply_elementwise(kernel, scalars, x2, tr, n_blocks):
    """Tiled elementwise pass; `scalars` is a tiny f32 vector kept in SMEM."""
    return pl.pallas_call(
        kernel,
        out_shape=jax.ShapeDtypeStruct(x2.shape, x2.dtype),
        grid=(n_blocks,),
        in_specs=[pl.BlockSpec(memory_space=pltpu.MemorySpace.SMEM),
                  pl.BlockSpec((tr, _LANE), lambda i: (i, 0))],
        out_specs=pl.BlockSpec((tr, _LANE), lambda i: (i, 0)),
        compiler_params=pltpu.CompilerParams(
            dimension_semantics=("parallel",)),
    )(scalars, x2)


def weight_quantize_fn(x, w_bit):
    """JAX/Pallas equivalent of the PyTorch weight_quantize_fn.forward."""
    assert w_bit <= 8 or w_bit == 32

    if w_bit == 32:
        # Pure passthrough: skip the kernel entirely (no HBM round trip).
        return x

    orig_shape = x.shape
    total = x.size
    x2, tr, n_blocks = _pack_lane_dense(x)

    if w_bit == 1:
        abs_sum = _global_scalar(_abssum_kernel, x2, tr, n_blocks)        # (1,1)
        e = (abs_sum / float(total)).reshape(1).astype(jnp.float32)       # mean|x|
        out2 = _apply_elementwise(_binary_apply_kernel, e, x2, tr, n_blocks)
    else:
        n = float(2 ** w_bit - 1)
        max_abs = _global_scalar(_absmax_kernel, x2, tr, n_blocks)        # (1,1)
        # tanh is odd & strictly increasing  =>  max|tanh(x)| == tanh(max|x|)
        scale = (0.5 / jnp.tanh(max_abs)).reshape(1).astype(jnp.float32)  # 1/(2m)
        kern = functools.partial(_kbit_apply_kernel, n=n, two_over_n=2.0 / n)
        out2 = _apply_elementwise(kern, scale, x2, tr, n_blocks)

    return out2.reshape(-1)[:total].reshape(orig_shape)


# ----------------------------- reference (plain JAX) ---------------------------
# Mathematically identical to the PyTorch forward; the scalar factors are
# pre-hoisted exactly as in the kernel so the self-check is not sensitive to
# sub-ulp reassociation right at quantization boundaries.


def _reference(x, w_bit):
    if w_bit == 32:
        return x
    if w_bit == 1:
        e = jnp.mean(jnp.abs(x))
        return jnp.sign(x) * e                 # == sign(x / E) * E for E > 0
    n = float(2 ** w_bit - 1)
    w = jnp.tanh(x)
    inv_2m = 0.5 / jnp.tanh(jnp.max(jnp.abs(x)))   # == 0.5 / max|tanh(x)|
    w = w * inv_2m + 0.5
    return jnp.round(w * n) * (2.0 / n) - 1.0


# ----------------------------- main ---------------------------------------------


if __name__ == "__main__":
    key = jax.random.PRNGKey(0)
    # Conv-weight-like tensor (out_ch, in_ch, kH, kW); the op is elementwise
    # plus a global scalar reduction, so it is layout-agnostic.
    x = jax.random.normal(key, (2, 4, 16, 16), dtype=jnp.float32)

    ok = True
    for w_bit in (1, 2, 4, 8, 32):
        out = jax.block_until_ready(weight_quantize_fn(x, w_bit))
        ref = _reference(x, w_bit)
        if not jnp.allclose(out, ref, atol=1e-5, rtol=1e-5):
            ok = False
            print(f"MISMATCH at w_bit={w_bit}: "
                  f"max_err={float(jnp.max(jnp.abs(out - ref)))}")

    if ok:
        print("KERNEL_OK")
</pallas_src>

<mosaic_0001>
module attributes {stable_mosaic.version = 11 : i64} {
  func.func @_abssum_kernel(%arg0: i32, %arg1: memref<4x512xf32, #tpu.memory_space<vmem>>, %arg2: memref<1x1xf32, #tpu.memory_space<vmem>>) attributes {dimension_semantics = [#tpu.dimension_semantics<arbitrary>], iteration_bounds = array<i64: 1>, scalar_prefetch = 0 : i64, scratch_operands = 0 : i64, tpu.core_type = #tpu.core_type<tc>, window_params = [{transform_indices = @transform_0, window_bounds = array<i64: 4, 512>}, {pipeline_mode = #tpu.pipeline_mode<synchronous>, transform_indices = @transform_1, window_bounds = array<i64: 1, 1>}]} {
    %c0_i32 = arith.constant 0 : i32
    %0 = arith.cmpi eq, %arg0, %c0_i32 : i32
    %1 = arith.extui %0 : i1 to i32
    %c0_i32_0 = arith.constant 0 : i32
    %2 = arith.cmpi ne, %1, %c0_i32_0 : i32
    scf.if %2 {
      %cst_7 = arith.constant 0.000000e+00 : f32
      %12 = vector.broadcast %cst_7 : f32 to vector<1x1xf32>
      %c0_8 = arith.constant 0 : index
      %c0_9 = arith.constant 0 : index
      %13 = vector.load %arg2[%c0_8, %c0_9] : memref<1x1xf32, #tpu.memory_space<vmem>>, vector<1x1xf32>
      tpu.vector_store %arg2[%c0_8, %c0_9], %12 {strides = array<i32>} : memref<1x1xf32, #tpu.memory_space<vmem>>, vector<1x1xf32>,
    } else {
    }
    %c0 = arith.constant 0 : index
    %c0_1 = arith.constant 0 : index
    %3 = vector.load %arg1[%c0, %c0_1] : memref<4x512xf32, #tpu.memory_space<vmem>>, vector<4x512xf32>
    %4 = math.absf %3 : vector<4x512xf32>
    %cst = arith.constant dense<0.000000e+00> : vector<4xf32>
    %5 = vector.multi_reduction <add>, %4, %cst [1] : vector<4x512xf32> to vector<4xf32>
    %6 = vector.shape_cast %5 : vector<4xf32> to vector<4x1xf32>
    %cst_2 = arith.constant dense<0.000000e+00> : vector<1xf32>
    %7 = vector.multi_reduction <add>, %6, %cst_2 [0] : vector<4x1xf32> to vector<1xf32>
    %8 = vector.shape_cast %7 : vector<1xf32> to vector<1x1xf32>
    %c0_3 = arith.constant 0 : index
    %c0_4 = arith.constant 0 : index
    %9 = vector.load %arg2[%c0_3, %c0_4] : memref<1x1xf32, #tpu.memory_space<vmem>>, vector<1x1xf32>
    %10 = arith.addf %9, %8 : vector<1x1xf32>
    %c0_5 = arith.constant 0 : index
    %c0_6 = arith.constant 0 : index
    %11 = vector.load %arg2[%c0_5, %c0_6] : memref<1x1xf32, #tpu.memory_space<vmem>>, vector<1x1xf32>
    tpu.vector_store %arg2[%c0_5, %c0_6], %10 {strides = array<i32>} : memref<1x1xf32, #tpu.memory_space<vmem>>, vector<1x1xf32>,
    return
  }
  func.func @transform_0(%arg0: i32) -> (i32, i32) {
    %c0_i32 = arith.constant 0 : i32
    %c0_i32_0 = arith.constant 0 : i32
    return %arg0, %c0_i32 : i32, i32
  }
  func.func @transform_1(%arg0: i32) -> (i32, i32) {
    %c0_i32 = arith.constant 0 : i32
    %c0_i32_0 = arith.constant 0 : i32
    %c0_i32_1 = arith.constant 0 : i32
    return %c0_i32, %c0_i32_0 : i32, i32
  }
}

</mosaic_0001>

<llo_original>
// kernel: tpu_custom_call.1
$region0: #{tpu_custom_call.1}
  #allocation0 [shape = 'u32[]', space=smem, size = 0x4, offset = 0x4, fixed_abs, tag = 'smem constant byte address 0x4 - core index']
  #allocation1 [shape = 'u32[144,128]{1,0:T(1,128)}', space=vmem, size = 0x12000, scoped, tag = 'internal scratch']
  %s0 = inlined_call_operand.hbm [shape: f32[4,512], index: 0, kind: input, shape index: {}]
  %s1 = inlined_call_operand.hbm [shape: f32[1,1], index: 1, kind: output, shape index: {}]
  %s2 = sld [smem:[#allocation0]]
  $region22: #{tpu_custom_call.1} parent=0
    _
  %s4 = ssub.s32 1, %s2
  %s5 = scalar_select 0, %s4, %s2
  $region1: #{tpu_custom_call.1} parent=0
    #allocation2 [shape = 'u8[8192]{0}', space=vmem, size = 0x2000, scoped, tag = 'input window, operand 0, single buffered']
    #allocation3 [shape = 's32[1]{0}', space=sflag, size = 0x4, scoped, tag = 'scoped memory for tpu_custom_call.1']
    #allocation4 [shape = 's32[1]{0}', space=sflag, size = 0x4, scoped, tag = 'scoped memory for tpu_custom_call.1']
    #allocation5 [shape = 'u8[512]{0}', space=vmem, size = 0x400, scoped, tag = 'output window, operand 0, single buffered']
    %6 = vsyncpa [#allocation3], 0
    %7 = vsyncpa [#allocation4], 0
    // Predicated region
    $region2: #{tpu_custom_call.1} parent=1 // pred_check
      _
    $region3: #{tpu_custom_call.1} parent=1 // pred_check_branch
      %9 = sbr.rel (0) target = $region5
    $region4: #{tpu_custom_call.1} parent=1 // pred_region
      %s11 = ssub.s32 256, 256
      %12 = vsyncadd [#allocation3], %s11
      %s14 = sshll.u32 [#allocation2], 4
      %s15 = int_to_ptr.vmem [resolvable:$true] %s14
      %17 = dma.hbm_to_vmem [thread:$0]  %s0, 256, %s15, [#allocation3]
    $region5: #{tpu_custom_call.1} parent=1 // pred_fallthru
      _
    // Predicated region
    $region6: #{tpu_custom_call.1} parent=1 // pred_check
      _
    $region7: #{tpu_custom_call.1} parent=1 // pred_check_branch
      %19 = sbr.rel (0) target = $region9
    $region8: #{tpu_custom_call.1} parent=1 // pred_region
      %20 = dma.done [#allocation3], 256
    $region9: #{tpu_custom_call.1} parent=1 // pred_fallthru
      _
    %p21 = scmp.eq.s32.totalorder 0, 0
    // Predicated region
    $region10: #{tpu_custom_call.1} parent=1 // pred_check
      %p22 = pneg %p21
    $region11: #{tpu_custom_call.1} parent=1 // pred_check_branch
      %24 = sbr.rel (%p22) target = $region13
    $region12: #{tpu_custom_call.1} parent=1 // pred_region
      %vm25 = vcmask 0
      %26 = vst.msk [vmem:[#allocation5] sm:$0x1] %vm25, 0.0
    $region13: #{tpu_custom_call.1} parent=1 // pred_fallthru
      _
    %v27 = vld [vmem:[#allocation2] sm:$0xff]
    %v28 = vld [vmem:[#allocation2 + $0x8] sm:$0xff]
    %v29 = vand.u32 2147483647, %v27
    %v30 = vand.u32 2147483647, %v28
    %v33 = vcombine.high %v29, %v29
    %v34 = vcombine.high %v30, %v30
    %vm37 = vcmask 1043456
    %v38 = vsel %vm37, %v29, 0.0
    %v39 = vsel %vm37, %v33, 0.0
    %v40 = vadd.f32 %v38, %v39
    %v41 = vsel %vm37, %v30, 0.0
    %v42 = vadd.f32 %v40, %v41
    %v43 = vsel %vm37, %v34, 0.0
    %v44 = vadd.f32 %v42, %v43
    %45 = vadd.xlane.f32.xlu0 %v44
    %v46 = vpop.xlane.xlu0 %45
    %v47 = vsel %vm37, %v46, 0.0
    %v48 = vrot.slane %v47, 4
    %v49 = vadd.f32 %v47, %v48
    %v50 = vrot.slane %v49, 2
    %v51 = vadd.f32 %v49, %v50
    %v52 = vrot.slane %v51, 1
    %v53 = vadd.f32 %v51, %v52
    %v54 = vld [vmem:[#allocation5] sm:$0x1]
    %v55 = vadd.f32 %v54, %v53
    %vm56 = vcmask 0
    %57 = vst.msk [vmem:[#allocation5] sm:$0x1] %vm56, %v55
    // Predicated region
    $region14: #{tpu_custom_call.1} parent=1 // pred_check
      _
    $region15: #{tpu_custom_call.1} parent=1 // pred_check_branch
      %59 = sbr.rel (0) target = $region17
    $region16: #{tpu_custom_call.1} parent=1 // pred_region
      %s61 = ssub.s32 16, 16
      %62 = vsyncadd [#allocation4], %s61
      %s64 = sshll.u32 [#allocation5], 4
      %s65 = int_to_ptr.vmem [resolvable:$true] %s64
      %67 = dma.vmem_to_hbm [thread:$0]  %s65, 16, %s1, [#allocation4]
    $region17: #{tpu_custom_call.1} parent=1 // pred_fallthru
      _
    // Predicated region
    $region18: #{tpu_custom_call.1} parent=1 // pred_check
      _
    $region19: #{tpu_custom_call.1} parent=1 // pred_check_branch
      %69 = sbr.rel (0) target = $region21
    $region20: #{tpu_custom_call.1} parent=1 // pred_region
      %70 = dma.done [#allocation4], 16
    $region21: #{tpu_custom_call.1} parent=1 // pred_fallthru
      _
    %71 = vsyncpa [#allocation3], 1
    %72 = vsyncpa [#allocation4], 1

</llo_original>
